<compile_context>
chip_gen: v6e
topology: v6e:2x2x1
jax: 0.10.0
libtpu: 0.0.40
codegen_flags: <defaults>
</compile_context>

<pallas_src>
import jax
import jax.numpy as jnp
from jax.experimental import pallas as pl
from jax.experimental.pallas import tpu as pltpu


def andnet_kernel(w1_ref, b1_ref, w2_ref, b2_ref, x_ref, o_ref):
    """One (2, tr, C) input tile -> (tr, C) output tile.

    x_ref[0] / x_ref[1] are the two input features as (tr, C) slabs (batch on
    sublanes AND lanes -> dense vregs).  Both contractions (K=2, K=4) are
    fully unrolled scalar*slab FMAs on the VPU; weights/biases are flattened
    1-D SMEM scalars.  Sigmoid uses the tanh identity (1 EUP op).
    """
    x0 = x_ref[0].astype(jnp.float32)            # (tr, C)
    x1 = x_ref[1].astype(jnp.float32)            # (tr, C)

    # fc2 accumulator, initialized with its bias.
    z2 = jnp.zeros_like(x0) + b2_ref[0]          # (tr, C)

    # Hidden width 4 -> fully unrolled; fc1 row j fused straight into fc2.
    for j in range(4):
        z1 = w1_ref[2 * j] * x0 + w1_ref[2 * j + 1] * x1 + b1_ref[j]
        h = 0.5 * jnp.tanh(0.5 * z1) + 0.5       # sigmoid via single EUP tanh
        z2 = z2 + w2_ref[j] * h

    o_ref[...] = (0.5 * jnp.tanh(0.5 * z2) + 0.5).astype(o_ref.dtype)


def andnet_forward_slab(x_slab, w1, b1, w2, b2, *, block_rows=512):
    """Core entry point. x_slab: (2, R, C) feature-major batch slab,
    C a multiple of 128, R a multiple of 8.  Returns (R, C) activations."""
    _, R, C = x_slab.shape
    tr = min(block_rows, R)
    assert R % tr == 0 and tr % 8 == 0 and C % 128 == 0

    return pl.pallas_call(
        andnet_kernel,
        out_shape=jax.ShapeDtypeStruct((R, C), x_slab.dtype),
        grid=(R // tr,),
        in_specs=[
            pl.BlockSpec(memory_space=pltpu.MemorySpace.SMEM),   # w1 flat (8,)
            pl.BlockSpec(memory_space=pltpu.MemorySpace.SMEM),   # b1 (4,)
            pl.BlockSpec(memory_space=pltpu.MemorySpace.SMEM),   # w2 flat (4,)
            pl.BlockSpec(memory_space=pltpu.MemorySpace.SMEM),   # b2 (1,)
            pl.BlockSpec((2, tr, C), lambda i: (0, i, 0)),       # x slab tile
        ],
        out_specs=pl.BlockSpec((tr, C), lambda i: (i, 0)),
        compiler_params=pltpu.CompilerParams(
            dimension_semantics=("parallel",),       # v7x: shard batch over 2 TCs
            vmem_limit_bytes=32 * 1024 * 1024,       # ~6 MB/tile actually used
        ),
    )(w1.reshape(-1), b1, w2.reshape(-1), b2, x_slab)


def andnet_forward(x, w1, b1, w2, b2, *, lane=512, block_rows=512):
    """Convenience wrapper for PyTorch layout.
    x: (B, 2); w1: (4, 2); b1: (4,); w2: (1, 4); b2: (1,).  Returns (B, 1).

    Does a single fused pad + transpose + reshape into the (2, R, C) slab
    layout.  For large-B production use, keep the input feature-major
    upstream and call andnet_forward_slab() directly to skip this copy.
    """
    B = x.shape[0]
    C = lane                                   # lane width (multiple of 128)
    R = max(8, pl.cdiv(B, C))
    R = pl.cdiv(R, 8) * 8                      # sublane-align rows
    tr = min(block_rows, R)
    R = pl.cdiv(R, tr) * tr                    # whole number of row tiles
    Bp = R * C

    xp = x if Bp == B else jnp.pad(x, ((0, Bp - B), (0, 0)))
    x_slab = xp.T.reshape(2, R, C)             # one feature-major copy

    out = andnet_forward_slab(x_slab, w1, b1, w2, b2, block_rows=tr)
    return out.reshape(Bp)[:B].reshape(B, 1)


def init_params(key):
    """Deterministic init matching nn.Linear parameter shapes."""
    k1, k2, k3, k4 = jax.random.split(key, 4)
    # fc1: Linear(2, 4) -> weight (4, 2), bias (4,)
    bound1 = 1.0 / jnp.sqrt(2.0)
    w1 = jax.random.uniform(k1, (4, 2), jnp.float32, -bound1, bound1)
    b1 = jax.random.uniform(k2, (4,), jnp.float32, -bound1, bound1)
    # fc2: Linear(4, 1) -> weight (1, 4), bias (1,)
    bound2 = 1.0 / jnp.sqrt(4.0)
    w2 = jax.random.uniform(k3, (1, 4), jnp.float32, -bound2, bound2)
    b2 = jax.random.uniform(k4, (1,), jnp.float32, -bound2, bound2)
    return w1, b1, w2, b2


def reference_forward(x, w1, b1, w2, b2):
    h = jax.nn.sigmoid(x @ w1.T + b1)
    return jax.nn.sigmoid(h @ w2.T + b2)


if __name__ == "__main__":
    key = jax.random.PRNGKey(0)
    kx, kp, kx2 = jax.random.split(key, 3)
    w1, b1, w2, b2 = init_params(kp)

    # Small batch of 2-feature inputs (AND-gate-style), B=8.
    x = jax.random.uniform(kx, (8, 2), jnp.float32)
    out = jax.block_until_ready(andnet_forward(x, w1, b1, w2, b2))
    ref = reference_forward(x, w1, b1, w2, b2)
    assert out.shape == (8, 1), out.shape
    assert jnp.allclose(out, ref, atol=2e-5, rtol=1e-4), "mismatch vs reference (B=8)"

    # Secondary check exercising padding (non-multiple-of-slab batch) and a
    # multi-tile grid (forces block_rows < R so grid > 1).
    x2 = jax.random.uniform(kx2, (300, 2), jnp.float32)
    out2 = jax.block_until_ready(
        andnet_forward(x2, w1, b1, w2, b2, lane=128, block_rows=8))
    ref2 = reference_forward(x2, w1, b1, w2, b2)
    assert out2.shape == (300, 1), out2.shape
    assert jnp.allclose(out2, ref2, atol=2e-5, rtol=1e-4), "mismatch vs reference (B=300)"

    print("KERNEL_OK")
</pallas_src>

<mosaic_0001>
module attributes {stable_mosaic.version = 11 : i64} {
  func.func @andnet_kernel(%arg0: i32, %arg1: memref<8xf32, #tpu.memory_space<smem>>, %arg2: memref<4xf32, #tpu.memory_space<smem>>, %arg3: memref<4xf32, #tpu.memory_space<smem>>, %arg4: memref<1xf32, #tpu.memory_space<smem>>, %arg5: memref<2x8x512xf32, #tpu.memory_space<vmem>>, %arg6: memref<8x512xf32, #tpu.memory_space<vmem>>) attributes {dimension_semantics = [#tpu.dimension_semantics<parallel>], iteration_bounds = array<i64: 1>, scalar_prefetch = 0 : i64, scratch_operands = 0 : i64, tpu.core_type = #tpu.core_type<tc>, window_params = [{transform_indices = @transform_0, window_bounds = array<i64: 8>}, {transform_indices = @transform_1, window_bounds = array<i64: 4>}, {transform_indices = @transform_2, window_bounds = array<i64: 4>}, {transform_indices = @transform_3, window_bounds = array<i64: 1>}, {transform_indices = @transform_4, window_bounds = array<i64: 2, 8, 512>}, {transform_indices = @transform_5, window_bounds = array<i64: 8, 512>}]} {
    %c0 = arith.constant 0 : index
    %c0_0 = arith.constant 0 : index
    %c0_1 = arith.constant 0 : index
    %0 = vector.load %arg5[%c0, %c0_0, %c0_1] : memref<2x8x512xf32, #tpu.memory_space<vmem>>, vector<1x8x512xf32>
    %1 = vector.shape_cast %0 : vector<1x8x512xf32> to vector<8x512xf32>
    %c1 = arith.constant 1 : index
    %c0_2 = arith.constant 0 : index
    %c0_3 = arith.constant 0 : index
    %2 = vector.load %arg5[%c1, %c0_2, %c0_3] : memref<2x8x512xf32, #tpu.memory_space<vmem>>, vector<1x8x512xf32>
    %3 = vector.shape_cast %2 : vector<1x8x512xf32> to vector<8x512xf32>
    %cst = arith.constant 0.000000e+00 : f32
    %4 = vector.broadcast %cst : f32 to vector<8x512xf32>
    %c0_4 = arith.constant 0 : index
    %5 = memref.load %arg4[%c0_4] : memref<1xf32, #tpu.memory_space<smem>>
    %6 = vector.broadcast %5 : f32 to vector<8x512xf32>
    %7 = arith.addf %4, %6 : vector<8x512xf32>
    %c0_5 = arith.constant 0 : index
    %8 = memref.load %arg1[%c0_5] : memref<8xf32, #tpu.memory_space<smem>>
    %9 = vector.broadcast %8 : f32 to vector<8x512xf32>
    %10 = arith.mulf %9, %1 : vector<8x512xf32>
    %c1_6 = arith.constant 1 : index
    %11 = memref.load %arg1[%c1_6] : memref<8xf32, #tpu.memory_space<smem>>
    %12 = vector.broadcast %11 : f32 to vector<8x512xf32>
    %13 = arith.mulf %12, %3 : vector<8x512xf32>
    %14 = arith.addf %10, %13 : vector<8x512xf32>
    %c0_7 = arith.constant 0 : index
    %15 = memref.load %arg2[%c0_7] : memref<4xf32, #tpu.memory_space<smem>>
    %16 = vector.broadcast %15 : f32 to vector<8x512xf32>
    %17 = arith.addf %14, %16 : vector<8x512xf32>
    %cst_8 = arith.constant 5.000000e-01 : f32
    %18 = vector.broadcast %cst_8 : f32 to vector<8x512xf32>
    %19 = arith.mulf %18, %17 : vector<8x512xf32>
    %20 = math.tanh %19 : vector<8x512xf32>
    %cst_9 = arith.constant 5.000000e-01 : f32
    %21 = vector.broadcast %cst_9 : f32 to vector<8x512xf32>
    %22 = arith.mulf %21, %20 : vector<8x512xf32>
    %cst_10 = arith.constant 5.000000e-01 : f32
    %23 = vector.broadcast %cst_10 : f32 to vector<8x512xf32>
    %24 = arith.addf %22, %23 : vector<8x512xf32>
    %c0_11 = arith.constant 0 : index
    %25 = memref.load %arg3[%c0_11] : memref<4xf32, #tpu.memory_space<smem>>
    %26 = vector.broadcast %25 : f32 to vector<8x512xf32>
    %27 = arith.mulf %26, %24 : vector<8x512xf32>
    %28 = arith.addf %7, %27 : vector<8x512xf32>
    %c2 = arith.constant 2 : index
    %29 = memref.load %arg1[%c2] : memref<8xf32, #tpu.memory_space<smem>>
    %30 = vector.broadcast %29 : f32 to vector<8x512xf32>
    %31 = arith.mulf %30, %1 : vector<8x512xf32>
    %c3 = arith.constant 3 : index
    %32 = memref.load %arg1[%c3] : memref<8xf32, #tpu.memory_space<smem>>
    %33 = vector.broadcast %32 : f32 to vector<8x512xf32>
    %34 = arith.mulf %33, %3 : vector<8x512xf32>
    %35 = arith.addf %31, %34 : vector<8x512xf32>
    %c1_12 = arith.constant 1 : index
    %36 = memref.load %arg2[%c1_12] : memref<4xf32, #tpu.memory_space<smem>>
    %37 = vector.broadcast %36 : f32 to vector<8x512xf32>
    %38 = arith.addf %35, %37 : vector<8x512xf32>
    %cst_13 = arith.constant 5.000000e-01 : f32
    %39 = vector.broadcast %cst_13 : f32 to vector<8x512xf32>
    %40 = arith.mulf %39, %38 : vector<8x512xf32>
    %41 = math.tanh %40 : vector<8x512xf32>
    %cst_14 = arith.constant 5.000000e-01 : f32
    %42 = vector.broadcast %cst_14 : f32 to vector<8x512xf32>
    %43 = arith.mulf %42, %41 : vector<8x512xf32>
    %cst_15 = arith.constant 5.000000e-01 : f32
    %44 = vector.broadcast %cst_15 : f32 to vector<8x512xf32>
    %45 = arith.addf %43, %44 : vector<8x512xf32>
    %c1_16 = arith.constant 1 : index
    %46 = memref.load %arg3[%c1_16] : memref<4xf32, #tpu.memory_space<smem>>
    %47 = vector.broadcast %46 : f32 to vector<8x512xf32>
    %48 = arith.mulf %47, %45 : vector<8x512xf32>
    %49 = arith.addf %28, %48 : vector<8x512xf32>
    %c4 = arith.constant 4 : index
    %50 = memref.load %arg1[%c4] : memref<8xf32, #tpu.memory_space<smem>>
    %51 = vector.broadcast %50 : f32 to vector<8x512xf32>
    %52 = arith.mulf %51, %1 : vector<8x512xf32>
    %c5 = arith.constant 5 : index
    %53 = memref.load %arg1[%c5] : memref<8xf32, #tpu.memory_space<smem>>
    %54 = vector.broadcast %53 : f32 to vector<8x512xf32>
    %55 = arith.mulf %54, %3 : vector<8x512xf32>
    %56 = arith.addf %52, %55 : vector<8x512xf32>
    %c2_17 = arith.constant 2 : index
    %57 = memref.load %arg2[%c2_17] : memref<4xf32, #tpu.memory_space<smem>>
    %58 = vector.broadcast %57 : f32 to vector<8x512xf32>
    %59 = arith.addf %56, %58 : vector<8x512xf32>
    %cst_18 = arith.constant 5.000000e-01 : f32
    %60 = vector.broadcast %cst_18 : f32 to vector<8x512xf32>
    %61 = arith.mulf %60, %59 : vector<8x512xf32>
    %62 = math.tanh %61 : vector<8x512xf32>
    %cst_19 = arith.constant 5.000000e-01 : f32
    %63 = vector.broadcast %cst_19 : f32 to vector<8x512xf32>
    %64 = arith.mulf %63, %62 : vector<8x512xf32>
    %cst_20 = arith.constant 5.000000e-01 : f32
    %65 = vector.broadcast %cst_20 : f32 to vector<8x512xf32>
    %66 = arith.addf %64, %65 : vector<8x512xf32>
    %c2_21 = arith.constant 2 : index
    %67 = memref.load %arg3[%c2_21] : memref<4xf32, #tpu.memory_space<smem>>
    %68 = vector.broadcast %67 : f32 to vector<8x512xf32>
    %69 = arith.mulf %68, %66 : vector<8x512xf32>
    %70 = arith.addf %49, %69 : vector<8x512xf32>
    %c6 = arith.constant 6 : index
    %71 = memref.load %arg1[%c6] : memref<8xf32, #tpu.memory_space<smem>>
    %72 = vector.broadcast %71 : f32 to vector<8x512xf32>
    %73 = arith.mulf %72, %1 : vector<8x512xf32>
    %c7 = arith.constant 7 : index
    %74 = memref.load %arg1[%c7] : memref<8xf32, #tpu.memory_space<smem>>
    %75 = vector.broadcast %74 : f32 to vector<8x512xf32>
    %76 = arith.mulf %75, %3 : vector<8x512xf32>
    %77 = arith.addf %73, %76 : vector<8x512xf32>
    %c3_22 = arith.constant 3 : index
    %78 = memref.load %arg2[%c3_22] : memref<4xf32, #tpu.memory_space<smem>>
    %79 = vector.broadcast %78 : f32 to vector<8x512xf32>
    %80 = arith.addf %77, %79 : vector<8x512xf32>
    %cst_23 = arith.constant 5.000000e-01 : f32
    %81 = vector.broadcast %cst_23 : f32 to vector<8x512xf32>
    %82 = arith.mulf %81, %80 : vector<8x512xf32>
    %83 = math.tanh %82 : vector<8x512xf32>
    %cst_24 = arith.constant 5.000000e-01 : f32
    %84 = vector.broadcast %cst_24 : f32 to vector<8x512xf32>
    %85 = arith.mulf %84, %83 : vector<8x512xf32>
    %cst_25 = arith.constant 5.000000e-01 : f32
    %86 = vector.broadcast %cst_25 : f32 to vector<8x512xf32>
    %87 = arith.addf %85, %86 : vector<8x512xf32>
    %c3_26 = arith.constant 3 : index
    %88 = memref.load %arg3[%c3_26] : memref<4xf32, #tpu.memory_space<smem>>
    %89 = vector.broadcast %88 : f32 to vector<8x512xf32>
    %90 = arith.mulf %89, %87 : vector<8x512xf32>
    %91 = arith.addf %70, %90 : vector<8x512xf32>
    %cst_27 = arith.constant 5.000000e-01 : f32
    %92 = vector.broadcast %cst_27 : f32 to vector<8x512xf32>
    %93 = arith.mulf %92, %91 : vector<8x512xf32>
    %94 = math.tanh %93 : vector<8x512xf32>
    %cst_28 = arith.constant 5.000000e-01 : f32
    %95 = vector.broadcast %cst_28 : f32 to vector<8x512xf32>
    %96 = arith.mulf %95, %94 : vector<8x512xf32>
    %cst_29 = arith.constant 5.000000e-01 : f32
    %97 = vector.broadcast %cst_29 : f32 to vector<8x512xf32>
    %98 = arith.addf %96, %97 : vector<8x512xf32>
    %c0_30 = arith.constant 0 : index
    %c0_31 = arith.constant 0 : index
    %99 = vector.load %arg6[%c0_30, %c0_31] : memref<8x512xf32, #tpu.memory_space<vmem>>, vector<8x512xf32>
    tpu.vector_store %arg6[%c0_30, %c0_31], %98 {strides = array<i32>} : memref<8x512xf32, #tpu.memory_space<vmem>>, vector<8x512xf32>,
    return
  }
  func.func @transform_0(%arg0: i32) -> i32 {
    %c0_i32 = arith.constant 0 : i32
    %c0_i32_0 = arith.constant 0 : i32
    return %c0_i32 : i32
  }
  func.func @transform_1(%arg0: i32) -> i32 {
    %c0_i32 = arith.constant 0 : i32
    %c0_i32_0 = arith.constant 0 : i32
    return %c0_i32 : i32
  }
  func.func @transform_2(%arg0: i32) -> i32 {
    %c0_i32 = arith.constant 0 : i32
    %c0_i32_0 = arith.constant 0 : i32
    return %c0_i32 : i32
  }
  func.func @transform_3(%arg0: i32) -> i32 {
    %c0_i32 = arith.constant 0 : i32
    %c0_i32_0 = arith.constant 0 : i32
    return %c0_i32 : i32
  }
  func.func @transform_4(%arg0: i32) -> (i32, i32, i32) {
    %c0_i32 = arith.constant 0 : i32
    %c0_i32_0 = arith.constant 0 : i32
    %c0_i32_1 = arith.constant 0 : i32
    return %c0_i32, %arg0, %c0_i32_0 : i32, i32, i32
  }
  func.func @transform_5(%arg0: i32) -> (i32, i32) {
    %c0_i32 = arith.constant 0 : i32
    %c0_i32_0 = arith.constant 0 : i32
    return %arg0, %c0_i32 : i32, i32
  }
}

</mosaic_0001>

<llo_original>
// kernel: tpu_custom_call.1
$region0: #{tpu_custom_call.1}
  #allocation0 [shape = 'u32[]', space=smem, size = 0x4, offset = 0x4, fixed_abs, tag = 'smem constant byte address 0x4 - core index']
  #allocation1 [shape = 'u32[144,128]{1,0:T(1,128)}', space=vmem, size = 0x12000, scoped, tag = 'internal scratch']
  #allocation2 [shape = 'f32[1]{0:T(128)S(6)}', space=smem, size = 0x200, scoped, tag = 'scoped memory for tpu_custom_call.1']
  %s0 = inlined_call_operand.vmem [shape: f32[8], index: 0, kind: input, shape index: {}]
  %s1 = inlined_call_operand.vmem [shape: f32[4], index: 1, kind: input, shape index: {}]
  %s2 = inlined_call_operand.vmem [shape: f32[4], index: 2, kind: input, shape index: {}]
  %s3 = inlined_call_operand.<no memory space> [shape: f32[1], index: 3, kind: input, shape index: {}]
  %s4 = inlined_call_operand.hbm [shape: f32[2,8,512], index: 4, kind: input, shape index: {}]
  %s5 = inlined_call_operand.hbm [shape: f32[8,512], index: 5, kind: output, shape index: {}]
  %s6 = sld [smem:[#allocation0]]
  $region46: #{tpu_custom_call.1} parent=0
    _
  %s8 = ssub.s32 1, %s6
  %s9 = scalar_select 0, %s8, %s6
  %10 = sst [smem:[#allocation2]] %s3
  $region1: #{tpu_custom_call.1} parent=0
    #allocation3 [shape = 'u8[512]{0}', space=smem, size = 0x200, scoped, tag = 'input window, operand 0, single buffered']
    #allocation4 [shape = 's32[1]{0}', space=sflag, size = 0x4, scoped, tag = 'scoped memory for tpu_custom_call.1']
    #allocation5 [shape = 's32[1]{0}', space=sflag, size = 0x4, scoped, tag = 'scoped memory for tpu_custom_call.1']
    #allocation6 [shape = 's32[1]{0}', space=sflag, size = 0x4, scoped, tag = 'scoped memory for tpu_custom_call.1']
    #allocation7 [shape = 'u8[512]{0}', space=smem, size = 0x200, scoped, tag = 'input window, operand 1, single buffered']
    #allocation8 [shape = 's32[1]{0}', space=sflag, size = 0x4, scoped, tag = 'scoped memory for tpu_custom_call.1']
    #allocation9 [shape = 'u8[512]{0}', space=smem, size = 0x200, scoped, tag = 'input window, operand 2, single buffered']
    #allocation10 [shape = 'u8[32768]{0}', space=vmem, size = 0x8000, scoped, tag = 'input window, operand 4, single buffered']
    #allocation11 [shape = 'u8[16384]{0}', space=vmem, size = 0x4000, scoped, tag = 'output window, operand 0, single buffered']
    %11 = vsyncpa [#allocation6], 0
    %12 = vsyncpa [#allocation8], 0
    %13 = vsyncpa [#allocation4], 0
    %14 = vsyncpa [#allocation5], 0
    // Predicated region
    $region2: #{tpu_custom_call.1} parent=1 // pred_check
      _
    $region3: #{tpu_custom_call.1} parent=1 // pred_check_branch
      %16 = sbr.rel (0) target = $region5
    $region4: #{tpu_custom_call.1} parent=1 // pred_region
      %s18 = ssub.s32 16, 16
      %19 = vsyncadd [#allocation6], %s18
      %s21 = sshll.u32 %s0, 4
      %s22 = int_to_ptr.vmem [resolvable:$true] %s21
      %24 = dma.vmem_to_smem %s22, 16, [#allocation3], [#allocation6]
    $region5: #{tpu_custom_call.1} parent=1 // pred_fallthru
      _
    // Predicated region
    $region6: #{tpu_custom_call.1} parent=1 // pred_check
      _
    $region7: #{tpu_custom_call.1} parent=1 // pred_check_branch
      %26 = sbr.rel (0) target = $region9
    $region8: #{tpu_custom_call.1} parent=1 // pred_region
      %s28 = ssub.s32 16, 16
      %29 = vsyncadd [#allocation8], %s28
      %s31 = sshll.u32 %s1, 4
      %s32 = int_to_ptr.vmem [resolvable:$true] %s31
      %34 = dma.vmem_to_smem %s32, 16, [#allocation7], [#allocation8]
    $region9: #{tpu_custom_call.1} parent=1 // pred_fallthru
      _
    // Predicated region
    $region10: #{tpu_custom_call.1} parent=1 // pred_check
      _
    $region11: #{tpu_custom_call.1} parent=1 // pred_check_branch
      %36 = sbr.rel (0) target = $region13
    $region12: #{tpu_custom_call.1} parent=1 // pred_region
      %s38 = ssub.s32 16, 16
      %39 = vsyncadd [#allocation8], %s38
      %s41 = sshll.u32 %s2, 4
      %s42 = int_to_ptr.vmem [resolvable:$true] %s41
      %44 = dma.vmem_to_smem %s42, 16, [#allocation9], [#allocation8]
    $region13: #{tpu_custom_call.1} parent=1 // pred_fallthru
      _
    // Predicated region
    $region14: #{tpu_custom_call.1} parent=1 // pred_check
      _
    $region15: #{tpu_custom_call.1} parent=1 // pred_check_branch
      %46 = sbr.rel (0) target = $region17
    $region16: #{tpu_custom_call.1} parent=1 // pred_region
      _
    $region17: #{tpu_custom_call.1} parent=1 // pred_fallthru
      _
    // Predicated region
    $region18: #{tpu_custom_call.1} parent=1 // pred_check
      _
    $region19: #{tpu_custom_call.1} parent=1 // pred_check_branch
      %48 = sbr.rel (0) target = $region21
    $region20: #{tpu_custom_call.1} parent=1 // pred_region
      %s50 = ssub.s32 1024, 1024
      %51 = vsyncadd [#allocation4], %s50
      %s52 = sshll.u32 [#allocation10], 4
      %s53 = int_to_ptr.vmem [resolvable:$true] %s52
      %58 = dma.hbm_to_vmem [thread:$0]  %s4, 1024, %s53, [#allocation4], 512, 512, 32
    $region21: #{tpu_custom_call.1} parent=1 // pred_fallthru
      _
    // Predicated region
    $region22: #{tpu_custom_call.1} parent=1 // pred_check
      _
    $region23: #{tpu_custom_call.1} parent=1 // pred_check_branch
      %60 = sbr.rel (0) target = $region25
    $region24: #{tpu_custom_call.1} parent=1 // pred_region
      %61 = dma.done [#allocation6], 16
    $region25: #{tpu_custom_call.1} parent=1 // pred_fallthru
      _
    // Predicated region
    $region26: #{tpu_custom_call.1} parent=1 // pred_check
      _
    $region27: #{tpu_custom_call.1} parent=1 // pred_check_branch
      %63 = sbr.rel (0) target = $region29
    $region28: #{tpu_custom_call.1} parent=1 // pred_region
      %64 = dma.done [#allocation8], 16
    $region29: #{tpu_custom_call.1} parent=1 // pred_fallthru
      _
    // Predicated region
    $region30: #{tpu_custom_call.1} parent=1 // pred_check
      _
    $region31: #{tpu_custom_call.1} parent=1 // pred_check_branch
      %66 = sbr.rel (0) target = $region33
    $region32: #{tpu_custom_call.1} parent=1 // pred_region
      %67 = dma.done [#allocation8], 16
    $region33: #{tpu_custom_call.1} parent=1 // pred_fallthru
      _
    // Predicated region
    $region34: #{tpu_custom_call.1} parent=1 // pred_check
      _
    $region35: #{tpu_custom_call.1} parent=1 // pred_check_branch
      %69 = sbr.rel (0) target = $region37
    $region36: #{tpu_custom_call.1} parent=1 // pred_region
      %70 = dma.done [#allocation4], 1024
    $region37: #{tpu_custom_call.1} parent=1 // pred_fallthru
      _
    %71 = sfence
    %v72 = vld [vmem:[#allocation10] sm:$0xff]
    %v73 = vld [vmem:[#allocation10 + $0x8] sm:$0xff]
    %v74 = vld [vmem:[#allocation10 + $0x10] sm:$0xff]
    %v75 = vld [vmem:[#allocation10 + $0x18] sm:$0xff]
    %s76 = scalar_lea.vmem [#allocation10], 32
    %v77 = vld [vmem:[%s76] sm:$0xff]
    %v78 = vld [vmem:[%s76 + $0x8] sm:$0xff]
    %v79 = vld [vmem:[%s76 + $0x10] sm:$0xff]
    %v80 = vld [vmem:[%s76 + $0x18] sm:$0xff]
    %s81 = sld [smem:[#allocation2]]
    %v82 = vstv %s81
    %v83 = vadd.f32 %v82, 0.0
    %s84 = sld [smem:[#allocation3]]
    %v85 = vstv %s84
    %v86 = vmul.f32 %v85, %v72
    %v87 = vmul.f32 %v85, %v73
    %v88 = vmul.f32 %v85, %v74
    %v89 = vmul.f32 %v85, %v75
    %s90 = sld [smem:[#allocation3 + $0x1]]
    %v91 = vstv %s90
    %v92 = vmul.f32 %v91, %v77
    %v93 = vmul.f32 %v91, %v78
    %v94 = vmul.f32 %v91, %v79
    %v95 = vmul.f32 %v91, %v80
    %v96 = vadd.f32 %v86, %v92
    %v97 = vadd.f32 %v87, %v93
    %v98 = vadd.f32 %v88, %v94
    %v99 = vadd.f32 %v89, %v95
    %s100 = sld [smem:[#allocation7]]
    %v101 = vstv %s100
    %v102 = vadd.f32 %v96, %v101
    %v103 = vadd.f32 %v97, %v101
    %v104 = vadd.f32 %v98, %v101
    %v105 = vadd.f32 %v99, %v101
    %v106 = vmul.f32 %v102, 0.5
    %v107 = vmul.f32 %v103, 0.5
    %v108 = vmul.f32 %v104, 0.5
    %v109 = vmul.f32 %v105, 0.5
    %v110 = vtanh.pop %v106
    %v111 = vtanh.pop %v107
    %v112 = vtanh.pop %v108
    %v113 = vtanh.pop %v109
    %v114 = vmul.f32 %v110, 0.5
    %v115 = vmul.f32 %v111, 0.5
    %v116 = vmul.f32 %v112, 0.5
    %v117 = vmul.f32 %v113, 0.5
    %v118 = vadd.f32 %v114, 0.5
    %v119 = vadd.f32 %v115, 0.5
    %v120 = vadd.f32 %v116, 0.5
    %v121 = vadd.f32 %v117, 0.5
    %s122 = sld [smem:[#allocation9]]
    %v123 = vstv %s122
    %v124 = vmul.f32 %v123, %v118
    %v125 = vmul.f32 %v123, %v119
    %v126 = vmul.f32 %v123, %v120
    %v127 = vmul.f32 %v123, %v121
    %v128 = vadd.f32 %v83, %v124
    %v129 = vadd.f32 %v83, %v125
    %v130 = vadd.f32 %v83, %v126
    %v131 = vadd.f32 %v83, %v127
    %s132 = sld [smem:[#allocation3 + $0x2]]
    %v133 = vstv %s132
    %v134 = vmul.f32 %v133, %v72
    %v135 = vmul.f32 %v133, %v73
    %v136 = vmul.f32 %v133, %v74
    %v137 = vmul.f32 %v133, %v75
    %s138 = sld [smem:[#allocation3 + $0x3]]
    %v139 = vstv %s138
    %v140 = vmul.f32 %v139, %v77
    %v141 = vmul.f32 %v139, %v78
    %v142 = vmul.f32 %v139, %v79
    %v143 = vmul.f32 %v139, %v80
    %v144 = vadd.f32 %v134, %v140
    %v145 = vadd.f32 %v135, %v141
    %v146 = vadd.f32 %v136, %v142
    %v147 = vadd.f32 %v137, %v143
    %s148 = sld [smem:[#allocation7 + $0x1]]
    %v149 = vstv %s148
    %v150 = vadd.f32 %v144, %v149
    %v151 = vadd.f32 %v145, %v149
    %v152 = vadd.f32 %v146, %v149
    %v153 = vadd.f32 %v147, %v149
    %v154 = vmul.f32 %v150, 0.5
    %v155 = vmul.f32 %v151, 0.5
    %v156 = vmul.f32 %v152, 0.5
    %v157 = vmul.f32 %v153, 0.5
    %v158 = vtanh.pop %v154
    %v159 = vtanh.pop %v155
    %v160 = vtanh.pop %v156
    %v161 = vtanh.pop %v157
    %v162 = vmul.f32 %v158, 0.5
    %v163 = vmul.f32 %v159, 0.5
    %v164 = vmul.f32 %v160, 0.5
    %v165 = vmul.f32 %v161, 0.5
    %v166 = vadd.f32 %v162, 0.5
    %v167 = vadd.f32 %v163, 0.5
    %v168 = vadd.f32 %v164, 0.5
    %v169 = vadd.f32 %v165, 0.5
    %s170 = sld [smem:[#allocation9 + $0x1]]
    %v171 = vstv %s170
    %v172 = vmul.f32 %v171, %v166
    %v173 = vmul.f32 %v171, %v167
    %v174 = vmul.f32 %v171, %v168
    %v175 = vmul.f32 %v171, %v169
    %v176 = vadd.f32 %v128, %v172
    %v177 = vadd.f32 %v129, %v173
    %v178 = vadd.f32 %v130, %v174
    %v179 = vadd.f32 %v131, %v175
    %s180 = sld [smem:[#allocation3 + $0x4]]
    %v181 = vstv %s180
    %v182 = vmul.f32 %v181, %v72
    %v183 = vmul.f32 %v181, %v73
    %v184 = vmul.f32 %v181, %v74
    %v185 = vmul.f32 %v181, %v75
    %s186 = sld [smem:[#allocation3 + $0x5]]
    %v187 = vstv %s186
    %v188 = vmul.f32 %v187, %v77
    %v189 = vmul.f32 %v187, %v78
    %v190 = vmul.f32 %v187, %v79
    %v191 = vmul.f32 %v187, %v80
    %v192 = vadd.f32 %v182, %v188
    %v193 = vadd.f32 %v183, %v189
    %v194 = vadd.f32 %v184, %v190
    %v195 = vadd.f32 %v185, %v191
    %s196 = sld [smem:[#allocation7 + $0x2]]
    %v197 = vstv %s196
    %v198 = vadd.f32 %v192, %v197
    %v199 = vadd.f32 %v193, %v197
    %v200 = vadd.f32 %v194, %v197
    %v201 = vadd.f32 %v195, %v197
    %v202 = vmul.f32 %v198, 0.5
    %v203 = vmul.f32 %v199, 0.5
    %v204 = vmul.f32 %v200, 0.5
    %v205 = vmul.f32 %v201, 0.5
    %v206 = vtanh.pop %v202
    %v207 = vtanh.pop %v203
    %v208 = vtanh.pop %v204
    %v209 = vtanh.pop %v205
    %v210 = vmul.f32 %v206, 0.5
    %v211 = vmul.f32 %v207, 0.5
    %v212 = vmul.f32 %v208, 0.5
    %v213 = vmul.f32 %v209, 0.5
    %v214 = vadd.f32 %v210, 0.5
    %v215 = vadd.f32 %v211, 0.5
    %v216 = vadd.f32 %v212, 0.5
    %v217 = vadd.f32 %v213, 0.5
    %s218 = sld [smem:[#allocation9 + $0x2]]
    %v219 = vstv %s218
    %v220 = vmul.f32 %v219, %v214
    %v221 = vmul.f32 %v219, %v215
    %v222 = vmul.f32 %v219, %v216
    %v223 = vmul.f32 %v219, %v217
    %v224 = vadd.f32 %v176, %v220
    %v225 = vadd.f32 %v177, %v221
    %v226 = vadd.f32 %v178, %v222
    %v227 = vadd.f32 %v179, %v223
    %s228 = sld [smem:[#allocation3 + $0x6]]
    %v229 = vstv %s228
    %v230 = vmul.f32 %v229, %v72
    %v231 = vmul.f32 %v229, %v73
    %v232 = vmul.f32 %v229, %v74
    %v233 = vmul.f32 %v229, %v75
    %s234 = sld [smem:[#allocation3 + $0x7]]
    %v235 = vstv %s234
    %v236 = vmul.f32 %v235, %v77
    %v237 = vmul.f32 %v235, %v78
    %v238 = vmul.f32 %v235, %v79
    %v239 = vmul.f32 %v235, %v80
    %v240 = vadd.f32 %v230, %v236
    %v241 = vadd.f32 %v231, %v237
    %v242 = vadd.f32 %v232, %v238
    %v243 = vadd.f32 %v233, %v239
    %s244 = sld [smem:[#allocation7 + $0x3]]
    %v245 = vstv %s244
    %v246 = vadd.f32 %v240, %v245
    %v247 = vadd.f32 %v241, %v245
    %v248 = vadd.f32 %v242, %v245
    %v249 = vadd.f32 %v243, %v245
    %v250 = vmul.f32 %v246, 0.5
    %v251 = vmul.f32 %v247, 0.5
    %v252 = vmul.f32 %v248, 0.5
    %v253 = vmul.f32 %v249, 0.5
    %v254 = vtanh.pop %v250
    %v255 = vtanh.pop %v251
    %v256 = vtanh.pop %v252
    %v257 = vtanh.pop %v253
    %v258 = vmul.f32 %v254, 0.5
    %v259 = vmul.f32 %v255, 0.5
    %v260 = vmul.f32 %v256, 0.5
    %v261 = vmul.f32 %v257, 0.5
    %v262 = vadd.f32 %v258, 0.5
    %v263 = vadd.f32 %v259, 0.5
    %v264 = vadd.f32 %v260, 0.5
    %v265 = vadd.f32 %v261, 0.5
    %s266 = sld [smem:[#allocation9 + $0x3]]
    %v267 = vstv %s266
    %v268 = vmul.f32 %v267, %v262
    %v269 = vmul.f32 %v267, %v263
    %v270 = vmul.f32 %v267, %v264
    %v271 = vmul.f32 %v267, %v265
    %v272 = vadd.f32 %v224, %v268
    %v273 = vadd.f32 %v225, %v269
    %v274 = vadd.f32 %v226, %v270
    %v275 = vadd.f32 %v227, %v271
    %v276 = vmul.f32 %v272, 0.5
    %v277 = vmul.f32 %v273, 0.5
    %v278 = vmul.f32 %v274, 0.5
    %v279 = vmul.f32 %v275, 0.5
    %v280 = vtanh.pop %v276
    %v281 = vtanh.pop %v277
    %v282 = vtanh.pop %v278
    %v283 = vtanh.pop %v279
    %v284 = vmul.f32 %v280, 0.5
    %v285 = vmul.f32 %v281, 0.5
    %v286 = vmul.f32 %v282, 0.5
    %v287 = vmul.f32 %v283, 0.5
    %v288 = vadd.f32 %v284, 0.5
    %v289 = vadd.f32 %v285, 0.5
    %v290 = vadd.f32 %v286, 0.5
    %v291 = vadd.f32 %v287, 0.5
    %292 = vst [vmem:[#allocation11] sm:$0xff] %v288
    %293 = vst [vmem:[#allocation11 + $0x8] sm:$0xff] %v289
    %294 = vst [vmem:[#allocation11 + $0x10] sm:$0xff] %v290
    %295 = vst [vmem:[#allocation11 + $0x18] sm:$0xff] %v291
    // Predicated region
    $region38: #{tpu_custom_call.1} parent=1 // pred_check
      _
    $region39: #{tpu_custom_call.1} parent=1 // pred_check_branch
      %297 = sbr.rel (0) target = $region41
    $region40: #{tpu_custom_call.1} parent=1 // pred_region
      %s299 = ssub.s32 512, 512
      %300 = vsyncadd [#allocation5], %s299
      %s302 = sshll.u32 [#allocation11], 4
      %s303 = int_to_ptr.vmem [resolvable:$true] %s302
      %305 = dma.vmem_to_hbm [thread:$0]  %s303, 512, %s5, [#allocation5]
    $region41: #{tpu_custom_call.1} parent=1 // pred_fallthru
      _
    // Predicated region
    $region42: #{tpu_custom_call.1} parent=1 // pred_check
      _
    $region43: #{tpu_custom_call.1} parent=1 // pred_check_branch
      %307 = sbr.rel (0) target = $region45
    $region44: #{tpu_custom_call.1} parent=1 // pred_region
      %308 = dma.done [#allocation5], 512
    $region45: #{tpu_custom_call.1} parent=1 // pred_fallthru
      _
    %309 = vsyncpa [#allocation4], 1
    %310 = vsyncpa [#allocation5], 1
    %311 = vsyncpa [#allocation6], 1
    %312 = vsyncpa [#allocation8], 1

</llo_original>
